<compile_context>
chip_gen: v6e
topology: v6e:2x2x1
jax: 0.10.0
libtpu: 0.0.40
codegen_flags: <defaults>
</compile_context>

<pallas_src>
import functools

import jax
import jax.numpy as jnp
from jax.experimental import pallas as pl
from jax.experimental.pallas import tpu as pltpu

_LANE = 128            # TPU lane width
_SUBLANE = 8           # f32 sublane multiple
_NO_GRID_MAX_B = 256   # below this, skip the pipeline machinery entirely
_DEFAULT_BLOCK_B = 4096  # per perf review: 2048-8192 row tiles


def _round_up(x, m):
    return ((x + m - 1) // m) * m


def _round_down(x, m):
    return max(m, (x // m) * m)


def _device_vmem_bytes():
    try:
        return int(pltpu.get_tpu_info().vmem_capacity_bytes)
    except Exception:
        return 64 * 1024 * 1024  # conservative default (v7x per-TensorCore VMEM)


def prepare_actor_params(weight, bias):
    """One-time parameter prep (hoisted out of the per-step forward).

    weight: [state_dim, action_dim]  (transpose of torch nn.Linear.weight)
    bias:   [action_dim]
    Returns (w_padded [state_dim, a_pad] f32, b_padded [1, a_pad] f32, action_dim)
    with the action axis padded to a lane multiple for lane-dense MXU/VPU work.
    """
    state_dim, action_dim = weight.shape
    a_pad = _round_up(action_dim, _LANE)
    w_p = weight.astype(jnp.float32)
    b_p = bias.astype(jnp.float32).reshape(1, action_dim)
    if a_pad != action_dim:
        w_p = jnp.pad(w_p, ((0, 0), (0, a_pad - action_dim)))
        b_p = jnp.pad(b_p, ((0, 0), (0, a_pad - action_dim)))
    return w_p, b_p, action_dim


def _actor_kernel(x_ref, w_ref, b_ref, lim_ref, o_ref, *, action_dim):
    """o = tanh((x @ W + b)[:, :action_dim]) * action_lim, f32 accumulate."""
    x = x_ref[...].astype(jnp.float32)           # mirrors torch `.float()`
    y = jnp.dot(x, w_ref[...], preferred_element_type=jnp.float32) + b_ref[...]
    lim = lim_ref[0, 0]
    o_ref[...] = (jnp.tanh(y[:, :action_dim]) * lim).astype(o_ref.dtype)


def actor_forward(state, w_padded, b_padded, action_dim, action_lim,
                  *, block_b=_DEFAULT_BLOCK_B):
    """
    state:    [B, state_dim] (any float dtype; cast to f32 like torch .float())
    w_padded: [state_dim, a_pad] f32   (from prepare_actor_params)
    b_padded: [1, a_pad] f32           (from prepare_actor_params)
    returns   [B, action_dim] float32
    """
    B, state_dim = state.shape
    a_pad = w_padded.shape[1]
    lim = jnp.asarray(action_lim, jnp.float32).reshape(1, 1)

    kernel = functools.partial(_actor_kernel, action_dim=action_dim)
    out_shape = jax.ShapeDtypeStruct((B, action_dim), jnp.float32)

    if B <= min(_NO_GRID_MAX_B, block_b):
        # Small case: no grid, no pipeline — whole arrays resident in VMEM,
        # action_lim in SMEM. Output is unpadded.
        return pl.pallas_call(
            kernel,
            out_shape=out_shape,
            in_specs=[
                pl.BlockSpec(memory_space=pltpu.MemorySpace.VMEM),
                pl.BlockSpec(memory_space=pltpu.MemorySpace.VMEM),
                pl.BlockSpec(memory_space=pltpu.MemorySpace.VMEM),
                pl.BlockSpec(memory_space=pltpu.MemorySpace.SMEM),
            ],
            out_specs=pl.BlockSpec(memory_space=pltpu.MemorySpace.VMEM),
        )(state, w_padded, b_padded, lim)

    # --- tile selection (no batch padding; ragged last tile is masked) -------
    bytes_per_row = 2 * (state_dim + action_dim) * 4   # dbl-buffered x + out, f32
    vmem_budget = _device_vmem_bytes() // 4            # pipeline/scratch headroom
    tb_cap = _round_down(vmem_budget // bytes_per_row, _SUBLANE)
    tb = min(
        _round_down(block_b, _SUBLANE),
        tb_cap,
        _round_up(pl.cdiv(B, 2), _SUBLANE),            # >=2 tiles -> both TCs on v7x
    )
    tb = max(tb, _SUBLANE)
    num_tiles = pl.cdiv(B, tb)

    # Explicit scoped-VMEM limit (v5e default is only ~16 MiB), capped well
    # under v7x's 64 MiB physical VMEM.
    vmem_limit = 2 * (tb * bytes_per_row + 2 * (state_dim + 1) * a_pad * 4) + (1 << 20)
    vmem_limit = int(min(max(vmem_limit, 16 << 20), 48 << 20))

    return pl.pallas_call(
        kernel,
        out_shape=out_shape,
        grid=(num_tiles,),
        in_specs=[
            pl.BlockSpec((tb, state_dim), lambda i: (i, 0)),
            pl.BlockSpec((state_dim, a_pad), lambda i: (0, 0)),   # resident weight
            pl.BlockSpec((1, a_pad), lambda i: (0, 0)),           # resident bias
            pl.BlockSpec((1, 1), lambda i: (0, 0),
                         memory_space=pltpu.MemorySpace.SMEM),    # action_lim scalar
        ],
        out_specs=pl.BlockSpec((tb, action_dim), lambda i: (i, 0)),  # unpadded store
        compiler_params=pltpu.CompilerParams(
            dimension_semantics=("parallel",),
            vmem_limit_bytes=vmem_limit),
    )(state, w_padded, b_padded, lim)


if __name__ == "__main__":
    state_dim = 16
    action_dim = 8
    action_lim = 2.0

    key = jax.random.PRNGKey(0)
    k_w, k_b, k_small, k_big = jax.random.split(key, 4)

    # torch nn.Linear default init: U(-1/sqrt(in), 1/sqrt(in)); weight stored
    # as [in, out] (transpose of torch's [out, in]) for x @ W.
    bound = 1.0 / jnp.sqrt(jnp.float32(state_dim))
    weight = jax.random.uniform(k_w, (state_dim, action_dim), jnp.float32,
                                minval=-bound, maxval=bound)
    bias = jax.random.uniform(k_b, (action_dim,), jnp.float32,
                              minval=-bound, maxval=bound)

    w_p, b_p, a_dim = prepare_actor_params(weight, bias)

    def ref_fn(s):
        return jnp.tanh(s.astype(jnp.float32) @ weight + bias[None, :]) * action_lim

    # --- small batch: exercises the no-grid / whole-array-in-VMEM path -------
    batch = 2
    state = jax.random.normal(k_small, (batch, state_dim), jnp.float32)
    out = jax.block_until_ready(actor_forward(state, w_p, b_p, a_dim, action_lim))
    assert out.shape == (batch, action_dim)
    assert jnp.allclose(out, ref_fn(state), atol=1e-5, rtol=1e-5)

    # --- larger, non-divisible batch: gridded path with ragged last tile -----
    batch2 = 300
    state2 = jax.random.normal(k_big, (batch2, state_dim), jnp.float32)
    out2 = jax.block_until_ready(
        actor_forward(state2, w_p, b_p, a_dim, action_lim, block_b=128))
    assert out2.shape == (batch2, action_dim)
    assert jnp.allclose(out2, ref_fn(state2), atol=1e-5, rtol=1e-5)

    print("KERNEL_OK")
</pallas_src>

<mosaic_0001>
module attributes {stable_mosaic.version = 11 : i64} {
  func.func @_actor_kernel(%arg0: memref<2x16xf32, #tpu.memory_space<vmem>>, %arg1: memref<16x128xf32, #tpu.memory_space<vmem>>, %arg2: memref<1x128xf32, #tpu.memory_space<vmem>>, %arg3: memref<1x1xf32, #tpu.memory_space<smem>>, %arg4: memref<2x8xf32, #tpu.memory_space<vmem>>) attributes {dimension_semantics = [], scalar_prefetch = 0 : i64, scratch_operands = 0 : i64, tpu.core_type = #tpu.core_type<tc>} {
    %c0 = arith.constant 0 : index
    %c0_0 = arith.constant 0 : index
    %0 = vector.load %arg0[%c0, %c0_0] : memref<2x16xf32, #tpu.memory_space<vmem>>, vector<2x16xf32>
    %c0_1 = arith.constant 0 : index
    %c0_2 = arith.constant 0 : index
    %1 = vector.load %arg1[%c0_1, %c0_2] : memref<16x128xf32, #tpu.memory_space<vmem>>, vector<16x128xf32>
    %cst = arith.constant dense<0.000000e+00> : vector<2x128xf32>
    %2 = tpu.matmul %0, %1, %cst {dimension_numbers = #tpu.dot_dimension_numbers<[1], [0], [0], [1], [0, 0, 1, 1], [], []>} : vector<2x16xf32>, vector<16x128xf32>, vector<2x128xf32> -> vector<2x128xf32>
    %c0_3 = arith.constant 0 : index
    %c0_4 = arith.constant 0 : index
    %3 = vector.load %arg2[%c0_3, %c0_4] : memref<1x128xf32, #tpu.memory_space<vmem>>, vector<1x128xf32>
    %4 = vector.broadcast %3 : vector<1x128xf32> to vector<2x128xf32>
    %5 = arith.addf %2, %4 : vector<2x128xf32>
    %c0_5 = arith.constant 0 : index
    %c0_6 = arith.constant 0 : index
    %6 = memref.load %arg3[%c0_5, %c0_6] : memref<1x1xf32, #tpu.memory_space<smem>>
    %7 = vector.extract_strided_slice %5 {offsets = [0, 0], sizes = [2, 8], strides = [1, 1]} : vector<2x128xf32> to vector<2x8xf32>
    %8 = math.tanh %7 : vector<2x8xf32>
    %9 = vector.broadcast %6 : f32 to vector<2x8xf32>
    %10 = arith.mulf %8, %9 : vector<2x8xf32>
    %c0_7 = arith.constant 0 : index
    %c0_8 = arith.constant 0 : index
    %11 = vector.load %arg4[%c0_7, %c0_8] : memref<2x8xf32, #tpu.memory_space<vmem>>, vector<2x8xf32>
    tpu.vector_store %arg4[%c0_7, %c0_8], %10 {strides = array<i32>} : memref<2x8xf32, #tpu.memory_space<vmem>>, vector<2x8xf32>,
    return
  }
}

</mosaic_0001>

<llo_original>
// kernel: tpu_custom_call.1
$region0: #{tpu_custom_call.1}
  #allocation0 [shape = 'u32[]', space=smem, size = 0x4, offset = 0x4, fixed_abs, tag = 'smem constant byte address 0x4 - core index']
  #allocation1 [shape = 'u32[144,128]{1,0:T(1,128)}', space=vmem, size = 0x12000, scoped, tag = 'internal scratch']
  #allocation2 [shape = 'f32[1,1]{1,0:T(1,128)S(6)}', space=smem, size = 0x200, scoped, tag = 'scoped memory for tpu_custom_call.1']
  %s0 = inlined_call_operand.vmem [shape: f32[2,16], index: 0, kind: input, shape index: {}]
  %s1 = inlined_call_operand.hbm [shape: f32[16,128], index: 1, kind: input, shape index: {}]
  %s2 = inlined_call_operand.vmem [shape: f32[1,128], index: 2, kind: input, shape index: {}]
  %s3 = inlined_call_operand.<no memory space> [shape: f32[1,1], index: 3, kind: input, shape index: {}]
  %s4 = inlined_call_operand.hbm [shape: f32[2,8], index: 4, kind: output, shape index: {}]
  %s5 = sld [smem:[#allocation0]]
  $region30: #{tpu_custom_call.1} parent=0
    _
  %s7 = ssub.s32 1, %s5
  %s8 = scalar_select 0, %s7, %s5
  %9 = sst [smem:[#allocation2]] %s3
  $region1: #{tpu_custom_call.1} parent=0
    #allocation3 [shape = 'u8[8192]{0}', space=vmem, size = 0x2000, scoped, tag = 'input window, operand 1, single buffered']
    #allocation4 [shape = 's32[1]{0}', space=sflag, size = 0x4, scoped, tag = 'scoped memory for tpu_custom_call.1']
    #allocation5 [shape = 's32[1]{0}', space=sflag, size = 0x4, scoped, tag = 'scoped memory for tpu_custom_call.1']
    #allocation6 [shape = 'u8[1024]{0}', space=vmem, size = 0x400, scoped, tag = 'output window, operand 0, single buffered']
    %10 = vsyncpa [#allocation4], 0
    %11 = vsyncpa [#allocation5], 0
    // Predicated region
    $region2: #{tpu_custom_call.1} parent=1 // pred_check
      _
    $region3: #{tpu_custom_call.1} parent=1 // pred_check_branch
      %13 = sbr.rel (0) target = $region5
    $region4: #{tpu_custom_call.1} parent=1 // pred_region
      _
    $region5: #{tpu_custom_call.1} parent=1 // pred_fallthru
      _
    // Predicated region
    $region6: #{tpu_custom_call.1} parent=1 // pred_check
      _
    $region7: #{tpu_custom_call.1} parent=1 // pred_check_branch
      %15 = sbr.rel (0) target = $region9
    $region8: #{tpu_custom_call.1} parent=1 // pred_region
      %s17 = ssub.s32 256, 256
      %18 = vsyncadd [#allocation4], %s17
      %s19 = sshll.u32 [#allocation3], 4
      %s20 = int_to_ptr.vmem [resolvable:$true] %s19
      %25 = dma.hbm_to_vmem [thread:$0]  %s1, 256, %s20, [#allocation4], 128, 128, 8
    $region9: #{tpu_custom_call.1} parent=1 // pred_fallthru
      _
    // Predicated region
    $region10: #{tpu_custom_call.1} parent=1 // pred_check
      _
    $region11: #{tpu_custom_call.1} parent=1 // pred_check_branch
      %27 = sbr.rel (0) target = $region13
    $region12: #{tpu_custom_call.1} parent=1 // pred_region
      _
    $region13: #{tpu_custom_call.1} parent=1 // pred_fallthru
      _
    // Predicated region
    $region14: #{tpu_custom_call.1} parent=1 // pred_check
      _
    $region15: #{tpu_custom_call.1} parent=1 // pred_check_branch
      %29 = sbr.rel (0) target = $region17
    $region16: #{tpu_custom_call.1} parent=1 // pred_region
      _
    $region17: #{tpu_custom_call.1} parent=1 // pred_fallthru
      _
    // Predicated region
    $region18: #{tpu_custom_call.1} parent=1 // pred_check
      _
    $region19: #{tpu_custom_call.1} parent=1 // pred_check_branch
      %31 = sbr.rel (0) target = $region21
    $region20: #{tpu_custom_call.1} parent=1 // pred_region
      %32 = dma.done [#allocation4], 256
    $region21: #{tpu_custom_call.1} parent=1 // pred_fallthru
      _
    %v33 = vld [vmem:[%s0] sm:$0x3]
    %v34 = vld [vmem:[#allocation3] sm:$0xff]
    %v35 = vld [vmem:[#allocation3 + $0x8] sm:$0xff]
    %v36 = vld [vmem:[%s2] sm:$0x1]
    %v38 = vlaneseq
    %v39 = vshrl.u32 %v38, 7
    %v40 = vsub.s32 0, %v39
    %v41 = vrot.slane %v36, %v40
    %vm43 = vcmask 130048
    %v45 = vsel %vm43, %v33, 0
    %47 = vmatprep.subr.mxu0 0.0
    %48 = vmatpush1.msra.mxu0 0.0
    %49 = vmatprep.subr.mxu0 0.0
    %50 = vmatpush1.msra.mxu0 0.0
    %51 = vmatprep.subr.mxu0 0.0
    %52 = vmatpush1.msra.mxu0 0.0
    %53 = vmatprep.subr.mxu0 0.0
    %54 = vmatpush1.msra.mxu0 0.0
    %55 = vmatprep.subr.mxu0 0.0
    %56 = vmatpush1.msra.mxu0 0.0
    %57 = vmatprep.subr.mxu0 0.0
    %58 = vmatpush1.msra.mxu0 0.0
    %59 = vmatprep.subr.mxu0 0.0
    %60 = vmatpush1.msra.mxu0 0.0
    %61 = vmatprep.subr.mxu0 0.0
    %62 = vmatpush1.msra.mxu0 0.0
    %63 = vmatprep.subr.mxu0 0.0
    %64 = vmatpush1.msra.mxu0 0.0
    %65 = vmatprep.subr.mxu0 0.0
    %66 = vmatpush1.msra.mxu0 0.0
    %67 = vmatprep.subr.mxu0 0.0
    %68 = vmatpush1.msra.mxu0 0.0
    %69 = vmatprep.subr.mxu0 0.0
    %70 = vmatpush1.msra.mxu0 0.0
    %71 = vmatprep.subr.mxu0 0.0
    %72 = vmatpush1.msra.mxu0 0.0
    %73 = vmatprep.subr.mxu0 0.0
    %74 = vmatpush1.msra.mxu0 0.0
    %75 = vmatprep.subr.mxu0 0.0
    %76 = vmatpush1.msra.mxu0 %v35
    %77 = vmatprep.subr.mxu0 0.0
    %78 = vmatpush1.msra.mxu0 %v34
    %79 = vmatprep.subr.mxu0 0.0
    %80 = vmatpush2.msra.mxu0 0.0
    %81 = vmatprep.subr.mxu0 0.0
    %82 = vmatpush2.msra.mxu0 0.0
    %83 = vmatprep.subr.mxu0 0.0
    %84 = vmatpush2.msra.mxu0 0.0
    %85 = vmatprep.subr.mxu0 0.0
    %86 = vmatpush2.msra.mxu0 0.0
    %87 = vmatprep.subr.mxu0 0.0
    %88 = vmatpush2.msra.mxu0 0.0
    %89 = vmatprep.subr.mxu0 0.0
    %90 = vmatpush2.msra.mxu0 0.0
    %91 = vmatprep.subr.mxu0 0.0
    %92 = vmatpush2.msra.mxu0 0.0
    %93 = vmatprep.subr.mxu0 0.0
    %94 = vmatpush2.msra.mxu0 0.0
    %95 = vmatprep.subr.mxu0 0.0
    %96 = vmatpush2.msra.mxu0 0.0
    %97 = vmatprep.subr.mxu0 0.0
    %98 = vmatpush2.msra.mxu0 0.0
    %99 = vmatprep.subr.mxu0 0.0
    %100 = vmatpush2.msra.mxu0 0.0
    %101 = vmatprep.subr.mxu0 0.0
    %102 = vmatpush2.msra.mxu0 0.0
    %103 = vmatprep.subr.mxu0 0.0
    %104 = vmatpush2.msra.mxu0 0.0
    %105 = vmatprep.subr.mxu0 0.0
    %106 = vmatpush2.msra.mxu0 0.0
    %107 = vmatprep.subr.mxu0 0.0
    %108 = vmatpush2.msra.mxu0 0.0
    %109 = vmatprep.subr.mxu0 0.0
    %110 = vmatpush2.msra.mxu0 0.0
    %111 = vmatprep.mubr.f32.mxu0 0.0
    %112 = vmatmul.mubr.f32.gmra.mxu0 %v45
    %v113 = vpop.f32.mrf.mxu0
    %v114 = vadd.f32 %v41, %v113
    %v115 = vpop.f32.mrf.mxu0
    %116 = vdwg.mxu0
    %s117 = sld [smem:[#allocation2]]
    %v118 = vtanh.pop %v114
    %v119 = vstv %s117
    %v120 = vmul.f32 %v118, %v119
    %vm121 = vcmask 58368
    %122 = vst.msk [vmem:[#allocation6] sm:$0x3] %vm121, %v120
    // Predicated region
    $region22: #{tpu_custom_call.1} parent=1 // pred_check
      _
    $region23: #{tpu_custom_call.1} parent=1 // pred_check_branch
      %124 = sbr.rel (0) target = $region25
    $region24: #{tpu_custom_call.1} parent=1 // pred_region
      %s126 = ssub.s32 32, 32
      %127 = vsyncadd [#allocation5], %s126
      %s129 = sshll.u32 [#allocation6], 4
      %s130 = int_to_ptr.vmem [resolvable:$true] %s129
      %132 = dma.vmem_to_hbm [thread:$0]  %s130, 32, %s4, [#allocation5]
    $region25: #{tpu_custom_call.1} parent=1 // pred_fallthru
      _
    // Predicated region
    $region26: #{tpu_custom_call.1} parent=1 // pred_check
      _
    $region27: #{tpu_custom_call.1} parent=1 // pred_check_branch
      %134 = sbr.rel (0) target = $region29
    $region28: #{tpu_custom_call.1} parent=1 // pred_region
      %135 = dma.done [#allocation5], 32
    $region29: #{tpu_custom_call.1} parent=1 // pred_fallthru
      _
    %136 = vsyncpa [#allocation4], 1
    %137 = vsyncpa [#allocation5], 1

</llo_original>
